<compile_context>
chip_gen: v7x
topology: tpu7x:2x2x1
jax: 0.10.0
libtpu: 0.0.40
codegen_flags: <defaults>
</compile_context>

<pallas_src>
import jax
import jax.numpy as jnp
from jax.experimental import pallas as pl
from jax.experimental.pallas import tpu as pltpu


FEAT_DIM = 512          # OSNet x0_25 feature dimension
PIXEL_MEAN = jnp.array([0.485, 0.456, 0.406], dtype=jnp.float32)
PIXEL_STD = jnp.array([0.229, 0.224, 0.225], dtype=jnp.float32)


def _reid_kernel(x_ref, w_ref, scale_ref, b_ref, o_ref):
    # x_ref:     (B_pad, TK)    bf16  raw pixels (0..255, exact in bf16), HWC flatten
    # w_ref:     (TK, DBLK)     int8  quantized, normalization-folded, HWC-permuted W
    # scale_ref: (1, DBLK)      f32   per-output-channel dequantization scale
    # b_ref:     (1, DBLK)      f32   normalization-folded bias
    # o_ref:     (B_pad, DBLK)  f32   resident output block == accumulator (same block
    #                                 index for every k -> lives in VMEM across the
    #                                 whole K reduction)
    k = pl.program_id(1)

    @pl.when(k == 0)
    def _():
        o_ref[...] = jnp.zeros_like(o_ref)

    # int8 -> bf16 cast is exact and runs on the VPU (lots of slack; HBM-bound kernel).
    o_ref[...] += jnp.dot(
        x_ref[...],
        w_ref[...].astype(jnp.bfloat16),
        preferred_element_type=jnp.float32,
    )

    @pl.when(k == pl.num_programs(1) - 1)
    def _():
        # Dequantization + folded-bias epilogue (per-output-channel scale).
        o_ref[...] = o_ref[...] * scale_ref[...] + b_ref[...]


def quantize_fold_permute_weights(w_chw, b, H, W_, C):
    """One-time constant preparation (would be done offline for a real checkpoint).

    w_chw : (K, D) f32 feature-head weights indexed by CHW-flattened pixel order
            (PyTorch layout).
    Returns (w_q_int8, scale_f32, b_folded_f32):
      * rows reordered to HWC flatten order (so the wrapper never transposes pixels),
      * ToTensor(/255) + Normalize affine folded in (scale on rows, offset into bias),
      * symmetric int8 quantization with per-output-channel scales.
    """
    K, D = w_chw.shape
    assert K == C * H * W_
    # CHW-ordered rows -> HWC-ordered rows (channel fastest).
    w_hwc = jnp.transpose(w_chw.reshape(C, H, W_, D), (1, 2, 0, 3)).reshape(K, D)
    # Per-element (channel-fastest) scale/offset of the preprocessing affine.
    row_scale = jnp.tile(1.0 / PIXEL_STD / 255.0, H * W_)          # (K,)
    offset = jnp.tile(PIXEL_MEAN / PIXEL_STD, H * W_)              # (K,)
    w_folded = w_hwc * row_scale[:, None]
    # Full-precision bias fold (elementwise mul + f32 reduce; offline cost only).
    b_folded = (b - jnp.sum(offset[:, None] * w_hwc, axis=0, keepdims=True)
                ).astype(jnp.float32)                              # (1, D)
    # Symmetric per-output-channel int8 quantization.
    max_abs = jnp.max(jnp.abs(w_folded), axis=0, keepdims=True)    # (1, D)
    scale = (jnp.maximum(max_abs, 1e-20) / 127.0).astype(jnp.float32)
    w_q = jnp.clip(jnp.round(w_folded / scale), -127, 127).astype(jnp.int8)
    return w_q, scale, b_folded


def _physical_vmem_bytes():
    try:
        return int(pltpu.get_tpu_info().vmem_capacity_bytes)
    except Exception:
        return 64 * 1024 * 1024        # conservative default (v7x per-TC VMEM)


def _pick_tk(K, d_block, B_pad, budget_per_buf):
    """Largest 128-multiple K tile whose int8 W column + bf16 x column fit the budget."""
    per_col_bytes = d_block + 2 * B_pad            # int8 weight col + bf16 pixel col
    cap = max(128, budget_per_buf // per_col_bytes // 128 * 128)
    k_rounded = -(-K // 128) * 128
    return min(cap, k_rounded)


def reid_forward(im_batch_u8, w_q, scale, b_folded, *, tk=None, d_block=None):
    """im_batch_u8: (B, H, W, C) uint8 crops (already at model input size).

    Caller-side note: concatenate as many crops as possible into one call -- the
    ~K*D-byte weight stream is paid once per call regardless of B.
    """
    B, H, W_, C = im_batch_u8.shape
    K = H * W_ * C
    D = w_q.shape[1]
    assert w_q.shape[0] == K and D % 128 == 0

    if d_block is None:
        # 256-wide output blocks stay lane-dense and let the leading "parallel" grid
        # axis shard the weight stream across both v7x TensorCores.
        d_block = 256 if D % 256 == 0 else D
    assert D % d_block == 0 and d_block % 128 == 0
    n_d = D // d_block

    # Pad batch to the bf16 sublane packing (16) so x tiles / stores are fully packed.
    B_pad = max(16, -(-B // 16) * 16)

    phys_vmem = _physical_vmem_bytes()
    if tk is None:
        # ~10% of physical VMEM per (double-buffered) weight buffer -> a handful of
        # K steps at the real K = 98304 (fewer on 128-MiB v5e/v6e, more on 64-MiB v7x).
        tk = _pick_tk(K, d_block, B_pad, budget_per_buf=phys_vmem // 10)
    assert tk % 128 == 0

    # Zero-pad K to a tk multiple: keeps the reduction exact and guarantees large
    # tiles even for awkward K.  (Done offline in a real deployment.)
    K_pad = -(-K // tk) * tk
    n_k = K_pad // tk

    # HWC flatten; uint8 pixel values (0..255) are exact in bf16.
    x = im_batch_u8.reshape(B, K).astype(jnp.bfloat16)
    if B_pad != B or K_pad != K:
        x = jnp.pad(x, ((0, B_pad - B), (0, K_pad - K)))
    if K_pad != K:
        w_q = jnp.pad(w_q, ((0, K_pad - K), (0, 0)))

    # Double-buffered working set (int8 W tile + bf16 x tile) plus resident output.
    need = 2 * tk * (d_block + 2 * B_pad) + 2 * B_pad * d_block * 4 + 4 * d_block * 4
    vmem_limit = int(min(max(32 * 1024 * 1024, 2 * need),
                         phys_vmem - 16 * 1024 * 1024))

    out = pl.pallas_call(
        _reid_kernel,
        out_shape=jax.ShapeDtypeStruct((B_pad, D), jnp.float32),
        grid=(n_d, n_k),
        in_specs=[
            pl.BlockSpec((B_pad, tk), lambda j, k: (0, k)),      # pixel tile over K
            # NOTE: pipeline_mode=pl.Buffered(3) here is worth a hardware sweep.
            pl.BlockSpec((tk, d_block), lambda j, k: (k, j)),    # int8 weight tile
            pl.BlockSpec((1, d_block), lambda j, k: (0, j)),     # dequant scale
            pl.BlockSpec((1, d_block), lambda j, k: (0, j)),     # folded bias
        ],
        out_specs=pl.BlockSpec((B_pad, d_block), lambda j, k: (0, j)),  # resident acc
        compiler_params=pltpu.CompilerParams(
            # D split is embarrassingly parallel (2 TCs on v7x); K is the reduction.
            dimension_semantics=("parallel", "arbitrary"),
            vmem_limit_bytes=vmem_limit,
        ),
        cost_estimate=pl.CostEstimate(
            flops=2 * B_pad * K_pad * D,
            transcendentals=0,
            bytes_accessed=(K_pad * D                  # int8 weights
                            + n_d * B_pad * K_pad * 2  # bf16 pixels (re-read per D blk)
                            + B_pad * D * 4            # f32 output
                            + 2 * D * 4),              # scale + bias
        ),
    )(x, w_q, scale, b_folded)
    return out[:B]


def _reference_module(im_batch_u8, w_chw, b):
    """Module semantics in plain f32 JAX (ToTensor + Normalize + linear head)."""
    B, H, W_, C = im_batch_u8.shape
    x = jnp.transpose(im_batch_u8, (0, 3, 1, 2)).astype(jnp.float32) / 255.0
    x = (x - PIXEL_MEAN[None, :, None, None]) / PIXEL_STD[None, :, None, None]
    return x.reshape(B, -1) @ w_chw + b


def _reference_quantized(im_batch_u8, w_q, scale, b_folded):
    """Exactly the quantized constants the kernel consumes (tight numerical check)."""
    B = im_batch_u8.shape[0]
    x = im_batch_u8.reshape(B, -1).astype(jnp.float32)
    return (x @ w_q.astype(jnp.float32)) * scale + b_folded


if __name__ == "__main__":
    key = jax.random.PRNGKey(0)
    k_img, k_w, k_b = jax.random.split(key, 3)

    # Small shapes consistent with the module: (B, H, W, C) uint8 crops
    # (the real model uses H=256, W=128, C=3; same aspect ratio here).
    B, H, W_, C = 2, 16, 8, 3
    K = H * W_ * C                 # 384
    D = FEAT_DIM                   # 512

    im_batch = jax.random.randint(
        k_img, (B, H, W_, C), 0, 256, dtype=jnp.int32
    ).astype(jnp.uint8)
    # Stand-in feature-head weights defined in the module's CHW flatten order.
    w_chw = jax.random.normal(k_w, (K, D), dtype=jnp.float32) * 0.02
    b = jax.random.normal(k_b, (1, D), dtype=jnp.float32) * 0.01

    # One-time folding / permutation / int8 quantization (offline in deployment).
    w_q, scale, b_folded = quantize_fold_permute_weights(w_chw, b, H, W_, C)

    # tk=128 -> 3 K steps x 2 D blocks: exercises the resident-accumulator reduction
    # and the parallel D split.
    feats = jax.block_until_ready(
        reid_forward(im_batch, w_q, scale, b_folded, tk=128))
    assert feats.shape == (B, D)

    # tk=256 -> K (=384) is zero-padded to 512: exercises the K-padding path.
    feats_pad = jax.block_until_ready(
        reid_forward(im_batch, w_q, scale, b_folded, tk=256))

    # Default path (tk chosen from the chip's VMEM -> single K step at this size).
    feats_auto = jax.block_until_ready(
        reid_forward(im_batch, w_q, scale, b_folded))

    # Tight check against the exact quantized constants the kernel consumes.
    ref_q = _reference_quantized(im_batch, w_q, scale, b_folded)
    for f in (feats, feats_pad, feats_auto):
        assert jnp.allclose(f, ref_q, atol=1e-3, rtol=1e-3)

    # Looser check against the module-semantics f32 path (int8 quantization error),
    # plus the feature-vector cosine similarity ReID actually cares about.
    ref_module = _reference_module(im_batch, w_chw, b)
    assert jnp.allclose(feats, ref_module, atol=5e-2, rtol=5e-2)
    cos = jnp.sum(feats * ref_module, axis=1) / (
        jnp.linalg.norm(feats, axis=1) * jnp.linalg.norm(ref_module, axis=1))
    assert bool(jnp.all(cos > 0.999))

    print("KERNEL_OK")
</pallas_src>

<mosaic_0001>
module attributes {stable_mosaic.version = 11 : i64} {
  func.func @_reid_kernel(%arg0: i32, %arg1: i32, %arg2: memref<16x128xbf16, #tpu.memory_space<vmem>>, %arg3: memref<128x256xi8, #tpu.memory_space<vmem>>, %arg4: memref<1x256xf32, #tpu.memory_space<vmem>>, %arg5: memref<1x256xf32, #tpu.memory_space<vmem>>, %arg6: memref<16x256xf32, #tpu.memory_space<vmem>>) attributes {dimension_semantics = [#tpu.dimension_semantics<parallel>, #tpu.dimension_semantics<arbitrary>], iteration_bounds = array<i64: 2, 3>, scalar_prefetch = 0 : i64, scratch_operands = 0 : i64, tpu.core_type = #tpu.core_type<tc>, window_params = [{transform_indices = @transform_0, window_bounds = array<i64: 16, 128>}, {transform_indices = @transform_1, window_bounds = array<i64: 128, 256>}, {transform_indices = @transform_2, window_bounds = array<i64: 1, 256>}, {transform_indices = @transform_3, window_bounds = array<i64: 1, 256>}, {transform_indices = @transform_4, window_bounds = array<i64: 16, 256>}]} {
    %c0_i32 = arith.constant 0 : i32
    %0 = arith.cmpi eq, %arg1, %c0_i32 : i32
    %1 = arith.extui %0 : i1 to i32
    %c0_i32_0 = arith.constant 0 : i32
    %2 = arith.cmpi ne, %1, %c0_i32_0 : i32
    scf.if %2 {
      %cst_9 = arith.constant 0.000000e+00 : f32
      %13 = vector.broadcast %cst_9 : f32 to vector<16x256xf32>
      %c0_10 = arith.constant 0 : index
      %c0_11 = arith.constant 0 : index
      %14 = vector.load %arg6[%c0_10, %c0_11] : memref<16x256xf32, #tpu.memory_space<vmem>>, vector<16x256xf32>
      tpu.vector_store %arg6[%c0_10, %c0_11], %13 {strides = array<i32>} : memref<16x256xf32, #tpu.memory_space<vmem>>, vector<16x256xf32>,
    } else {
    }
    %c0 = arith.constant 0 : index
    %c0_1 = arith.constant 0 : index
    %3 = vector.load %arg6[%c0, %c0_1] : memref<16x256xf32, #tpu.memory_space<vmem>>, vector<16x256xf32>
    %c0_2 = arith.constant 0 : index
    %c0_3 = arith.constant 0 : index
    %4 = vector.load %arg2[%c0_2, %c0_3] : memref<16x128xbf16, #tpu.memory_space<vmem>>, vector<16x128xbf16>
    %c0_4 = arith.constant 0 : index
    %c0_5 = arith.constant 0 : index
    %5 = vector.load %arg3[%c0_4, %c0_5] : memref<128x256xi8, #tpu.memory_space<vmem>>, vector<128x256xi8>
    %6 = arith.sitofp %5 : vector<128x256xi8> to vector<128x256xbf16>
    %cst = arith.constant dense<0.000000e+00> : vector<16x256xf32>
    %7 = tpu.matmul %4, %6, %cst {dimension_numbers = #tpu.dot_dimension_numbers<[1], [0], [0], [1], [0, 0, 1, 1], [], []>} : vector<16x128xbf16>, vector<128x256xbf16>, vector<16x256xf32> -> vector<16x256xf32>
    %8 = arith.addf %3, %7 : vector<16x256xf32>
    %c0_6 = arith.constant 0 : index
    %c0_7 = arith.constant 0 : index
    %9 = vector.load %arg6[%c0_6, %c0_7] : memref<16x256xf32, #tpu.memory_space<vmem>>, vector<16x256xf32>
    tpu.vector_store %arg6[%c0_6, %c0_7], %8 {strides = array<i32>} : memref<16x256xf32, #tpu.memory_space<vmem>>, vector<16x256xf32>,
    %c2_i32 = arith.constant 2 : i32
    %10 = arith.cmpi eq, %arg1, %c2_i32 : i32
    %11 = arith.extui %10 : i1 to i32
    %c0_i32_8 = arith.constant 0 : i32
    %12 = arith.cmpi ne, %11, %c0_i32_8 : i32
    scf.if %12 {
      %c0_9 = arith.constant 0 : index
      %c0_10 = arith.constant 0 : index
      %13 = vector.load %arg6[%c0_9, %c0_10] : memref<16x256xf32, #tpu.memory_space<vmem>>, vector<16x256xf32>
      %c0_11 = arith.constant 0 : index
      %c0_12 = arith.constant 0 : index
      %14 = vector.load %arg4[%c0_11, %c0_12] : memref<1x256xf32, #tpu.memory_space<vmem>>, vector<1x256xf32>
      %15 = vector.broadcast %14 : vector<1x256xf32> to vector<16x256xf32>
      %16 = arith.mulf %13, %15 : vector<16x256xf32>
      %c0_13 = arith.constant 0 : index
      %c0_14 = arith.constant 0 : index
      %17 = vector.load %arg5[%c0_13, %c0_14] : memref<1x256xf32, #tpu.memory_space<vmem>>, vector<1x256xf32>
      %18 = vector.broadcast %17 : vector<1x256xf32> to vector<16x256xf32>
      %19 = arith.addf %16, %18 : vector<16x256xf32>
      %c0_15 = arith.constant 0 : index
      %c0_16 = arith.constant 0 : index
      %20 = vector.load %arg6[%c0_15, %c0_16] : memref<16x256xf32, #tpu.memory_space<vmem>>, vector<16x256xf32>
      tpu.vector_store %arg6[%c0_15, %c0_16], %19 {strides = array<i32>} : memref<16x256xf32, #tpu.memory_space<vmem>>, vector<16x256xf32>,
    } else {
    }
    return
  }
  func.func @transform_0(%arg0: i32, %arg1: i32) -> (i32, i32) {
    %c0_i32 = arith.constant 0 : i32
    %c0_i32_0 = arith.constant 0 : i32
    return %c0_i32, %arg1 : i32, i32
  }
  func.func @transform_1(%arg0: i32, %arg1: i32) -> (i32, i32) {
    %c0_i32 = arith.constant 0 : i32
    return %arg1, %arg0 : i32, i32
  }
  func.func @transform_2(%arg0: i32, %arg1: i32) -> (i32, i32) {
    %c0_i32 = arith.constant 0 : i32
    %c0_i32_0 = arith.constant 0 : i32
    return %c0_i32, %arg0 : i32, i32
  }
  func.func @transform_3(%arg0: i32, %arg1: i32) -> (i32, i32) {
    %c0_i32 = arith.constant 0 : i32
    %c0_i32_0 = arith.constant 0 : i32
    return %c0_i32, %arg0 : i32, i32
  }
  func.func @transform_4(%arg0: i32, %arg1: i32) -> (i32, i32) {
    %c0_i32 = arith.constant 0 : i32
    %c0_i32_0 = arith.constant 0 : i32
    return %c0_i32, %arg0 : i32, i32
  }
}

</mosaic_0001>

<llo_original>
// kernel: tpu_custom_call.1
$region0: #{tpu_custom_call.1}
  #allocation0 [shape = 'u32[]', space=smem, size = 0x4, offset = 0x4, fixed_abs, tag = 'smem constant byte address 0x4 - core index']
  #allocation1 [shape = 'u32[144,128]{1,0:T(1,128)}', space=vmem, size = 0x12000, scoped, tag = 'internal scratch']
  %s0 = inlined_call_operand.hbm [shape: bf16[16,384], index: 0, kind: input, shape index: {}]
  %s1 = inlined_call_operand.hbm [shape: s8[384,512], index: 1, kind: input, shape index: {}]
  %s2 = inlined_call_operand.vmem [shape: f32[1,512], index: 2, kind: input, shape index: {}]
  %s3 = inlined_call_operand.vmem [shape: f32[1,512], index: 3, kind: input, shape index: {}]
  %s4 = inlined_call_operand.hbm [shape: f32[16,512], index: 4, kind: output, shape index: {}]
  %s5 = sld [smem:[#allocation0]]
  $region65: #{tpu_custom_call.1} parent=0
    _
  %s7 = ssub.s32 1, %s5
  %s8 = scalar_select 0, %s7, %s5
  $region1: #{tpu_custom_call.1} parent=0
    #allocation2 [shape = 'u8[8192]{0}', space=vmem, size = 0x2000, scoped, tag = 'input window, operand 0']
    #allocation3 [shape = 's32[2]{0}', space=sflag, size = 0x8, scoped, tag = 'scoped memory for tpu_custom_call.1']
    #allocation4 [shape = 's32[2]{0}', space=sflag, size = 0x8, scoped, tag = 'scoped memory for tpu_custom_call.1']
    #allocation5 [shape = 'u8[65536]{0}', space=vmem, size = 0x10000, scoped, tag = 'input window, operand 1']
    #allocation6 [shape = 's32[2]{0}', space=sflag, size = 0x8, scoped, tag = 'scoped memory for tpu_custom_call.1']
    #allocation7 [shape = 'u8[32768]{0}', space=vmem, size = 0x8000, scoped, tag = 'output window, operand 0']
    %9 = vsyncpa [#allocation3], 0
    %s10 = scalar_lea.sflag [#allocation3], 1
    %11 = vsyncpa %s10, 0
    %12 = vsyncpa [#allocation6], 0
    %s13 = scalar_lea.sflag [#allocation6], 1
    %14 = vsyncpa %s13, 0
    %15 = vsyncpa [#allocation4], 0
    %s16 = scalar_lea.sflag [#allocation4], 1
    %17 = vsyncpa %s16, 0
    loop: start=0, step=1, limit=8
    $region2: #{tpu_custom_call.1} parent=1 // loop_pre_header
      _
    $region3: #{tpu_custom_call.1} parent=1 // loop_header
      %s19 = sphi 0, %s23
      %p20 = scmp.ge.s32.totalorder %s19, 8
      %s26 = sphi 0, %s38
      %s27 = sphi 0, %s34
      %s28 = sphi 0, %s26
      %s29 = sphi 0, %s27
      %s30 = sphi 0, %s28
      %s31 = sphi 0, %s29
      %s41 = sphi 0, %s43
      %s44 = sphi 0, %s41
      %s45 = sphi 0, %s44
      %s61 = sphi 0, %s45
      %s69 = sphi 0, %s71
      %s72 = sphi 0, %s69
      %s73 = sphi 0, %s72
      %s89 = sphi 0, %s73
      %s95 = sphi 0, %s97
      %s98 = sphi 0, %s95
      %s99 = sphi 0, %s98
      %s115 = sphi 0, %s99
      %s121 = sphi 0, %s123
      %s124 = sphi 0, %s121
      %s125 = sphi 0, %s124
      %s141 = sphi 0, %s125
      %s147 = sphi 0, %s149
      %s150 = sphi 0, %s147
      %s151 = sphi 0, %s150
      %s167 = sphi 0, %s151
    $region4: #{tpu_custom_call.1} parent=1 // loop_header_branch
      %22 = sbr.rel (%p20) target = $region8
    $region5: #{tpu_custom_call.1} parent=1 // loop_body
      %s24 = ssub.s32 %s19, 1
      %s25 = ssub.s32 %s19, 2
      %s32 = sadd.s32 1, %s27
      %p33 = scmp.ge.s32.totalorder %s32, 3
      %s34 = scalar_select %p33, 0, %s32
      %s35 = sadd.s32 1, %s26
      %s36 = scalar_select %p33, %s35, %s26
      %p37 = scmp.ge.s32.totalorder %s36, 2
      %s38 = scalar_select %p37, 0, %s36
      %s39 = ssub.s32 %s27, %s34
      %p40 = scmp.eq.s32.totalorder %s39, 0
      %s42 = sadd.s32 %s41, 1
      %s43 = scalar_select %p40, %s41, %s42
      %p46 = pneg %p40
      %p47 = scmp.eq.s32.totalorder %s19, 5
      %p48 = por %p46, %p47
      %p49 = scmp.ne.s32.totalorder %s41, %s44
      %p50 = scmp.eq.s32.totalorder %s19, 0
      %p51 = por %p49, %p50
      %p52 = scmp.ne.s32.totalorder %s41, %s44
      %p53 = scmp.eq.s32.totalorder %s24, 5
      %p54 = por %p52, %p53
      %p55 = scmp.ne.s32.totalorder %s44, %s45
      %p56 = scmp.eq.s32.totalorder %s24, 0
      %p57 = por %p55, %p56
      %p58 = scmp.ne.s32.totalorder %s44, %s45
      %p59 = scmp.eq.s32.totalorder %s25, 5
      %p60 = por %p58, %p59
      %p62 = scmp.ne.s32.totalorder %s45, %s61
      %p63 = scmp.eq.s32.totalorder %s25, 0
      %p64 = por %p62, %p63
      %s65 = ssub.s32 %s27, %s34
      %s66 = ssub.s32 %s26, %s38
      %s67 = sor.u32 %s65, %s66
      %p68 = scmp.eq.s32.totalorder %s67, 0
      %s70 = sadd.s32 %s69, 1
      %s71 = scalar_select %p68, %s69, %s70
      %p74 = pneg %p68
      %p75 = scmp.eq.s32.totalorder %s19, 5
      %p76 = por %p74, %p75
      %p77 = scmp.ne.s32.totalorder %s69, %s72
      %p78 = scmp.eq.s32.totalorder %s19, 0
      %p79 = por %p77, %p78
      %p80 = scmp.ne.s32.totalorder %s69, %s72
      %p81 = scmp.eq.s32.totalorder %s24, 5
      %p82 = por %p80, %p81
      %p83 = scmp.ne.s32.totalorder %s72, %s73
      %p84 = scmp.eq.s32.totalorder %s24, 0
      %p85 = por %p83, %p84
      %p86 = scmp.ne.s32.totalorder %s72, %s73
      %p87 = scmp.eq.s32.totalorder %s25, 5
      %p88 = por %p86, %p87
      %p90 = scmp.ne.s32.totalorder %s73, %s89
      %p91 = scmp.eq.s32.totalorder %s25, 0
      %p92 = por %p90, %p91
      %s93 = ssub.s32 %s26, %s38
      %p94 = scmp.eq.s32.totalorder %s93, 0
      %s96 = sadd.s32 %s95, 1
      %s97 = scalar_select %p94, %s95, %s96
      %p100 = pneg %p94
      %p101 = scmp.eq.s32.totalorder %s19, 5
      %p102 = por %p100, %p101
      %p103 = scmp.ne.s32.totalorder %s95, %s98
      %p104 = scmp.eq.s32.totalorder %s19, 0
      %p105 = por %p103, %p104
      %p106 = scmp.ne.s32.totalorder %s95, %s98
      %p107 = scmp.eq.s32.totalorder %s24, 5
      %p108 = por %p106, %p107
      %p109 = scmp.ne.s32.totalorder %s98, %s99
      %p110 = scmp.eq.s32.totalorder %s24, 0
      %p111 = por %p109, %p110
      %p112 = scmp.ne.s32.totalorder %s98, %s99
      %p113 = scmp.eq.s32.totalorder %s25, 5
      %p114 = por %p112, %p113
      %p116 = scmp.ne.s32.totalorder %s99, %s115
      %p117 = scmp.eq.s32.totalorder %s25, 0
      %p118 = por %p116, %p117
      %s119 = ssub.s32 %s26, %s38
      %p120 = scmp.eq.s32.totalorder %s119, 0
      %s122 = sadd.s32 %s121, 1
      %s123 = scalar_select %p120, %s121, %s122
      %p126 = pneg %p120
      %p127 = scmp.eq.s32.totalorder %s19, 5
      %p128 = por %p126, %p127
      %p129 = scmp.ne.s32.totalorder %s121, %s124
      %p130 = scmp.eq.s32.totalorder %s19, 0
      %p131 = por %p129, %p130
      %p132 = scmp.ne.s32.totalorder %s121, %s124
      %p133 = scmp.eq.s32.totalorder %s24, 5
      %p134 = por %p132, %p133
      %p135 = scmp.ne.s32.totalorder %s124, %s125
      %p136 = scmp.eq.s32.totalorder %s24, 0
      %p137 = por %p135, %p136
      %p138 = scmp.ne.s32.totalorder %s124, %s125
      %p139 = scmp.eq.s32.totalorder %s25, 5
      %p140 = por %p138, %p139
      %p142 = scmp.ne.s32.totalorder %s125, %s141
      %p143 = scmp.eq.s32.totalorder %s25, 0
      %p144 = por %p142, %p143
      %s145 = ssub.s32 %s26, %s38
      %p146 = scmp.eq.s32.totalorder %s145, 0
      %s148 = sadd.s32 %s147, 1
      %s149 = scalar_select %p146, %s147, %s148
      %p152 = pneg %p146
      %p153 = scmp.eq.s32.totalorder %s19, 5
      %p154 = por %p152, %p153
      %p155 = scmp.ne.s32.totalorder %s147, %s150
      %p156 = scmp.eq.s32.totalorder %s19, 0
      %p157 = por %p155, %p156
      %p158 = scmp.ne.s32.totalorder %s147, %s150
      %p159 = scmp.eq.s32.totalorder %s24, 5
      %p160 = por %p158, %p159
      %p161 = scmp.ne.s32.totalorder %s150, %s151
      %p162 = scmp.eq.s32.totalorder %s24, 0
      %p163 = por %p161, %p162
      %p164 = scmp.ne.s32.totalorder %s150, %s151
      %p165 = scmp.eq.s32.totalorder %s25, 5
      %p166 = por %p164, %p165
      %p168 = scmp.ne.s32.totalorder %s151, %s167
      %p169 = scmp.eq.s32.totalorder %s25, 0
      %p170 = por %p168, %p169
      %p171 = scmp.le.s32.totalorder 1, %s19
      %p172 = scmp.lt.s32.totalorder %s19, 7
      %p173 = pnand %p171, %p172
      %p174 = pneg %p173
      // Predicated region
      $region9: #{tpu_custom_call.1} parent=5 // pred_check
        _
      $region10: #{tpu_custom_call.1} parent=5 // pred_check_branch
        %176 = sbr.rel (%p173) target = $region12
      $region11: #{tpu_custom_call.1} parent=5 // pred_region
        %s177 = ssub.s32 %s19, 1
      $region12: #{tpu_custom_call.1} parent=5 // pred_fallthru
        _
      %p178 = scmp.lt.s32.totalorder %s19, 6
      // Predicated region
      $region13: #{tpu_custom_call.1} parent=5 // pred_check
        %p179 = pneg %p178
      $region14: #{tpu_custom_call.1} parent=5 // pred_check_branch
        %181 = sbr.rel (%p179) target = $region16
      $region15: #{tpu_custom_call.1} parent=5 // pred_region
        // Predicated region
        $region17: #{tpu_custom_call.1} parent=15 // pred_check
          %p182 = pneg %p51
        $region18: #{tpu_custom_call.1} parent=15 // pred_check_branch
          %184 = sbr.rel (%p182) target = $region20
        $region19: #{tpu_custom_call.1} parent=15 // pred_region
          %s185 = sand.u32 %s41, 1
          %s186 = scalar_lea.sflag [#allocation3], %s185
          %s187 = sand.u32 %s41, 1
          %s188 = smul.addr %s187, 8
          %s189 = scalar_lea.vmem [#allocation2], %s188
          %s191 = ssub.s32 128, 128
          %192 = vsyncadd %s186, %s191
          %s193 = smul.addr %s27, 64
          %s194 = scalar_lea.hbm %s0, %s193
          %s195 = sshll.u32 %s189, 4
          %s196 = int_to_ptr.vmem [resolvable:$true] %s195
          %201 = dma.hbm_to_vmem [thread:$0]  %s194, 128, %s196, %s186, 192, 64, 4
        $region20: #{tpu_custom_call.1} parent=15 // pred_fallthru
          _
        // Predicated region
        $region21: #{tpu_custom_call.1} parent=15 // pred_check
          %p202 = pneg %p79
        $region22: #{tpu_custom_call.1} parent=15 // pred_check_branch
          %204 = sbr.rel (%p202) target = $region24
        $region23: #{tpu_custom_call.1} parent=15 // pred_region
          %s205 = sand.u32 %s69, 1
          %s206 = scalar_lea.sflag [#allocation6], %s205
          %s207 = sand.u32 %s69, 1
          %s208 = smul.addr %s207, 64
          %s209 = scalar_lea.vmem [#allocation5], %s208
          %s210 = smul.u32 4, %s27
          %s211 = smul.u32 2, %s26
          %s213 = ssub.s32 1024, 1024
          %214 = vsyncadd %s206, %s213
          %s215 = smul.addr %s210, 4
          %s216 = sadd.s32 %s211, %s215
          %s217 = smul.addr %s216, 128
          %s218 = scalar_lea.hbm %s1, %s217
          %s219 = sshll.u32 %s209, 4
          %s220 = int_to_ptr.vmem [resolvable:$true] %s219
          %225 = dma.hbm_to_vmem [thread:$0]  %s218, 1024, %s220, %s206, 512, 256, 16
        $region24: #{tpu_custom_call.1} parent=15 // pred_fallthru
          _
        // Predicated region
        $region25: #{tpu_custom_call.1} parent=15 // pred_check
          %p226 = pneg %p105
        $region26: #{tpu_custom_call.1} parent=15 // pred_check_branch
          %228 = sbr.rel (%p226) target = $region28
        $region27: #{tpu_custom_call.1} parent=15 // pred_region
          %s229 = smul.u32 2, %s26
          %p230 = scmp.lt.s32.totalorder %s229, 3
          %s231 = scalar_select %p230, %s229, 3
          %s232 = scalar_lea.vmem %s2, %s231
          %s233 = smul.u32 2, %s26
        $region28: #{tpu_custom_call.1} parent=15 // pred_fallthru
          _
        // Predicated region
        $region29: #{tpu_custom_call.1} parent=15 // pred_check
          %p234 = pneg %p131
        $region30: #{tpu_custom_call.1} parent=15 // pred_check_branch
          %236 = sbr.rel (%p234) target = $region32
        $region31: #{tpu_custom_call.1} parent=15 // pred_region
          %s237 = smul.u32 2, %s26
          %p238 = scmp.lt.s32.totalorder %s237, 3
          %s239 = scalar_select %p238, %s237, 3
          %s240 = scalar_lea.vmem %s3, %s239
          %s241 = smul.u32 2, %s26
        $region32: #{tpu_custom_call.1} parent=15 // pred_fallthru
          _
      $region16: #{tpu_custom_call.1} parent=5 // pred_fallthru
        _
      %p242 = scmp.le.s32.totalorder 1, %s19
      %p243 = scmp.lt.s32.totalorder %s19, 7
      %p244 = pnand %p242, %p243
      %p245 = pneg %p244
      // Predicated region
      $region33: #{tpu_custom_call.1} parent=5 // pred_check
        _
      $region34: #{tpu_custom_call.1} parent=5 // pred_check_branch
        %247 = sbr.rel (%p244) target = $region36
      $region35: #{tpu_custom_call.1} parent=5 // pred_region
        %s248 = ssub.s32 %s19, 1
        %s249 = sand.u32 %s44, 1
        %s250 = scalar_lea.sflag [#allocation3], %s249
        %s251 = sand.u32 %s44, 1
        %s252 = smul.addr %s251, 8
        %s253 = scalar_lea.vmem [#allocation2], %s252
        // Predicated region
        $region37: #{tpu_custom_call.1} parent=35 // pred_check
          %p254 = pneg %p57
        $region38: #{tpu_custom_call.1} parent=35 // pred_check_branch
          %256 = sbr.rel (%p254) target = $region40
        $region39: #{tpu_custom_call.1} parent=35 // pred_region
          %257 = dma.done %s250, 128
        $region40: #{tpu_custom_call.1} parent=35 // pred_fallthru
          _
        %s258 = sand.u32 %s72, 1
        %s259 = scalar_lea.sflag [#allocation6], %s258
        %s260 = sand.u32 %s72, 1
        %s261 = smul.addr %s260, 64
        %s262 = scalar_lea.vmem [#allocation5], %s261
        // Predicated region
        $region41: #{tpu_custom_call.1} parent=35 // pred_check
          %p263 = pneg %p85
        $region42: #{tpu_custom_call.1} parent=35 // pred_check_branch
          %265 = sbr.rel (%p263) target = $region44
        $region43: #{tpu_custom_call.1} parent=35 // pred_region
          %266 = dma.done %s259, 1024
        $region44: #{tpu_custom_call.1} parent=35 // pred_fallthru
          _
        %s267 = sand.u32 %s44, 1
        %s268 = scalar_lea.sflag [#allocation3], %s267
        %s269 = sand.u32 %s44, 1
        %s270 = smul.addr %s269, 8
        %s271 = scalar_lea.vmem [#allocation2], %s270
        %p272 = pneg %p57
        %p273 = pneg %p54
        %s274 = sand.u32 %s72, 1
        %s275 = scalar_lea.sflag [#allocation6], %s274
        %s276 = sand.u32 %s72, 1
        %s277 = smul.addr %s276, 64
        %s278 = scalar_lea.vmem [#allocation5], %s277
        %p279 = pneg %p85
        %p280 = pneg %p82
        %s281 = smul.u32 2, %s28
        %p282 = scmp.lt.s32.totalorder %s281, 3
        %s283 = scalar_select %p282, %s281, 3
        %s284 = scalar_lea.vmem %s2, %s283
        %p285 = pneg %p111
        %p286 = pneg %p108
        %s287 = smul.u32 2, %s28
        %p288 = scmp.lt.s32.totalorder %s287, 3
        %s289 = scalar_select %p288, %s287, 3
        %s290 = scalar_lea.vmem %s3, %s289
        %p291 = pneg %p137
        %p292 = pneg %p134
        %p293 = pneg %p163
        %p294 = pneg %p160
        %s295 = sand.u32 %s150, 1
        %s296 = scalar_lea.sflag [#allocation4], %s295
        %s297 = sand.u32 %s150, 1
        %s298 = smul.addr %s297, 32
        %s299 = scalar_lea.vmem [#allocation7], %s298
        %s300 = smul.u32 4, %s29
        %s301 = smul.u32 2, %s28
        %s302 = smul.u32 2, %s28
        %p303 = scmp.lt.s32.totalorder %s302, 3
        %s304 = scalar_select %p303, %s302, 3
        %s305 = scalar_lea.vmem %s2, %s304
        %s306 = smul.u32 2, %s28
        %s307 = smul.u32 2, %s28
        %p308 = scmp.lt.s32.totalorder %s307, 3
        %s309 = scalar_select %p308, %s307, 3
        %s310 = scalar_lea.vmem %s3, %s309
        %s311 = smul.u32 2, %s28
        %s312 = smul.u32 2, %s28
        %p314 = scmp.eq.s32.totalorder %s29, 0
        // Predicated region
        $region45: #{tpu_custom_call.1} parent=35 // pred_check
          %p315 = pneg %p314
        $region46: #{tpu_custom_call.1} parent=35 // pred_check_branch
          %317 = sbr.rel (%p315) target = $region48
        $region47: #{tpu_custom_call.1} parent=35 // pred_region
          %318 = vst [vmem:[%s299] sm:$0xff] 0.0
          %319 = vst [vmem:[%s299 + $0x8] sm:$0xff] 0.0
          %320 = vst [vmem:[%s299 + $0x10] sm:$0xff] 0.0
          %321 = vst [vmem:[%s299 + $0x18] sm:$0xff] 0.0
        $region48: #{tpu_custom_call.1} parent=35 // pred_fallthru
          _
        %v322 = vld [vmem:[%s299] sm:$0xff]
        %v323 = vld [vmem:[%s299 + $0x8] sm:$0xff]
        %v324 = vld [vmem:[%s299 + $0x10] sm:$0xff]
        %v325 = vld [vmem:[%s299 + $0x18] sm:$0xff]
        %v326 = vld [vmem:[%s253] sm:$0xf]
        %v327 = vld [vmem:[%s253 + $0x4] sm:$0xf]
        %v328 = vld [vmem:[%s262] sm:$0xff]
        %v329 = vld [vmem:[%s262 + $0x8] sm:$0xff]
        %v330 = vld [vmem:[%s262 + $0x10] sm:$0xff]
        %v331 = vld [vmem:[%s262 + $0x18] sm:$0xff]
        %v332 = vld [vmem:[%s262 + $0x20] sm:$0xff]
        %v333 = vld [vmem:[%s262 + $0x28] sm:$0xff]
        %v334 = vld [vmem:[%s262 + $0x30] sm:$0xff]
        %v335 = vld [vmem:[%s262 + $0x38] sm:$0xff]
        %v336 = vunpack.c.l.s8.bf16 %v328
        %v337 = vunpack.c.l.s8.bf16 %v329
        %v338 = vunpack.c.h.s8.bf16 %v328
        %v339 = vunpack.c.h.s8.bf16 %v329
        %v340 = vunpack.c.l.s8.bf16 %v330
        %v341 = vunpack.c.l.s8.bf16 %v331
        %v342 = vunpack.c.h.s8.bf16 %v330
        %v343 = vunpack.c.h.s8.bf16 %v331
        %v344 = vunpack.c.l.s8.bf16 %v332
        %v345 = vunpack.c.l.s8.bf16 %v333
        %v346 = vunpack.c.h.s8.bf16 %v332
        %v347 = vunpack.c.h.s8.bf16 %v333
        %v348 = vunpack.c.l.s8.bf16 %v334
        %v349 = vunpack.c.l.s8.bf16 %v335
        %v350 = vunpack.c.h.s8.bf16 %v334
        %v351 = vunpack.c.h.s8.bf16 %v335
        %v354 = vunpack.c.l.b16 %v326
        %v355 = vunpack.c.l.b16 %v327
        %v356 = vpack.c.b16 %v355, %v354
        %358 = vmatprep.subr.bf16.mxu0 %v337
        %359 = vmatpush1.bf16.msra.mxu0 %v336
        %360 = vmatprep.subr.bf16.mxu0 %v339
        %361 = vmatpush1.bf16.msra.mxu0 %v338
        %362 = vmatprep.subr.bf16.mxu0 %v341
        %363 = vmatpush1.bf16.msra.mxu0 %v340
        %364 = vmatprep.subr.bf16.mxu0 %v343
        %365 = vmatpush1.bf16.msra.mxu0 %v342
        %366 = vmatprep.subr.bf16.mxu0 %v345
        %367 = vmatpush1.bf16.msra.mxu0 %v344
        %368 = vmatprep.subr.bf16.mxu0 %v347
        %369 = vmatpush1.bf16.msra.mxu0 %v346
        %370 = vmatprep.subr.bf16.mxu0 %v349
        %371 = vmatpush1.bf16.msra.mxu0 %v348
        %372 = vmatprep.subr.bf16.mxu0 %v351
        %373 = vmatpush1.bf16.msra.mxu0 %v350
        %374 = vmatprep.subr.bf16.mxu0 0
        %375 = vmatpush1.bf16.msra.mxu0 0
        %376 = vmatprep.subr.bf16.mxu0 0
        %377 = vmatpush1.bf16.msra.mxu0 0
        %378 = vmatprep.subr.bf16.mxu0 0
        %379 = vmatpush1.bf16.msra.mxu0 0
        %380 = vmatprep.subr.bf16.mxu0 0
        %381 = vmatpush1.bf16.msra.mxu0 0
        %382 = vmatprep.subr.bf16.mxu0 0
        %383 = vmatpush1.bf16.msra.mxu0 0
        %384 = vmatprep.subr.bf16.mxu0 0
        %385 = vmatpush1.bf16.msra.mxu0 0
        %386 = vmatprep.subr.bf16.mxu0 0
        %387 = vmatpush1.bf16.msra.mxu0 0
        %388 = vmatprep.subr.bf16.mxu0 0
        %389 = vmatpush1.bf16.msra.mxu0 0
        %390 = vmatprep.mubr.bf16.mxu0 0
        %391 = vmatmul.mubr.bf16.gmra.mrb[0].mxu0 %v356
        %v392 = vpop.f32.mrb[0].mxu0
        %v393 = vadd.f32 0.0, %v392
        %v394 = vpop.f32.mrb[0].mxu0
        %v395 = vadd.f32 0.0, %v394
        %v396 = vpop.f32.mrb[0].mxu0
        %v397 = vadd.f32 0.0, %v396
        %v398 = vpop.f32.mrb[0].mxu0
        %v399 = vadd.f32 0.0, %v398
        %400 = vdwg.mxu0
        %v401 = vadd.f32 %v322, %v393
        %v402 = vadd.f32 %v323, %v395
        %v403 = vadd.f32 %v324, %v397
        %v404 = vadd.f32 %v325, %v399
        %405 = vst [vmem:[%s299] sm:$0xff] %v401
        %406 = vst [vmem:[%s299 + $0x8] sm:$0xff] %v402
        %407 = vst [vmem:[%s299 + $0x10] sm:$0xff] %v403
        %408 = vst [vmem:[%s299 + $0x18] sm:$0xff] %v404
        %p409 = scmp.eq.s32.totalorder %s29, 2
        // Predicated region
        $region49: #{tpu_custom_call.1} parent=35 // pred_check
          %p410 = pneg %p409
        $region50: #{tpu_custom_call.1} parent=35 // pred_check_branch
          %412 = sbr.rel (%p410) target = $region52
        $region51: #{tpu_custom_call.1} parent=35 // pred_region
          %v413 = vld [vmem:[%s299] sm:$0xff]
          %v414 = vld [vmem:[%s299 + $0x8] sm:$0xff]
          %v415 = vld [vmem:[%s299 + $0x10] sm:$0xff]
          %v416 = vld [vmem:[%s299 + $0x18] sm:$0xff]
          %v417 = vld [vmem:[%s305] sm:$0x3]
          %v419 = vlaneseq
          %v420 = vshrl.u32 %v419, 7
          %v421 = vsub.s32 0, %v420
          %v422 = vrot.slane %v417, %v421
          %v423 = vlaneseq
          %v424 = vshrl.u32 %v423, 7
          %v425 = vsub.s32 1, %v424
          %v426 = vrot.slane %v417, %v425
          %v429 = vmul.f32 %v413, %v422
          %v430 = vmul.f32 %v414, %v426
          %v431 = vmul.f32 %v415, %v422
          %v432 = vmul.f32 %v416, %v426
          %v433 = vld [vmem:[%s310] sm:$0x3]
          %v435 = vlaneseq
          %v436 = vshrl.u32 %v435, 7
          %v437 = vsub.s32 0, %v436
          %v438 = vrot.slane %v433, %v437
          %v439 = vlaneseq
          %v440 = vshrl.u32 %v439, 7
          %v441 = vsub.s32 1, %v440
          %v442 = vrot.slane %v433, %v441
          %v445 = vadd.f32 %v429, %v438
          %v446 = vadd.f32 %v430, %v442
          %v447 = vadd.f32 %v431, %v438
          %v448 = vadd.f32 %v432, %v442
          %449 = vst [vmem:[%s299] sm:$0xff] %v445
          %450 = vst [vmem:[%s299 + $0x8] sm:$0xff] %v446
          %451 = vst [vmem:[%s299 + $0x10] sm:$0xff] %v447
          %452 = vst [vmem:[%s299 + $0x18] sm:$0xff] %v448
        $region52: #{tpu_custom_call.1} parent=35 // pred_fallthru
          _
        %s453 = sand.u32 %s150, 1
        %s454 = scalar_lea.sflag [#allocation4], %s453
        %s455 = sand.u32 %s150, 1
        %s456 = smul.addr %s455, 32
        %s457 = scalar_lea.vmem [#allocation7], %s456
        // Predicated region
        $region53: #{tpu_custom_call.1} parent=35 // pred_check
          %p458 = pneg %p160
        $region54: #{tpu_custom_call.1} parent=35 // pred_check_branch
          %460 = sbr.rel (%p458) target = $region56
        $region55: #{tpu_custom_call.1} parent=35 // pred_region
          %s461 = smul.u32 2, %s28
          %s463 = ssub.s32 512, 512
          %464 = vsyncadd %s454, %s463
          %s465 = smul.addr %s461, 128
          %s466 = scalar_lea.hbm %s4, %s465
          %s467 = sshll.u32 %s457, 4
          %s468 = int_to_ptr.vmem [resolvable:$true] %s467
          %473 = dma.vmem_to_hbm [thread:$0]  %s468, 512, %s466, %s454, 256, 512, 16
        $region56: #{tpu_custom_call.1} parent=35 // pred_fallthru
          _
      $region36: #{tpu_custom_call.1} parent=5 // pred_fallthru
        _
      %p474 = scmp.le.s32.totalorder 2, %s19
      // Predicated region
      $region57: #{tpu_custom_call.1} parent=5 // pred_check
        %p475 = pneg %p474
      $region58: #{tpu_custom_call.1} parent=5 // pred_check_branch
        %477 = sbr.rel (%p475) target = $region60
      $region59: #{tpu_custom_call.1} parent=5 // pred_region
        %s478 = ssub.s32 %s19, 2
        // Predicated region
        $region61: #{tpu_custom_call.1} parent=59 // pred_check
          %p479 = pneg %p166
        $region62: #{tpu_custom_call.1} parent=59 // pred_check_branch
          %481 = sbr.rel (%p479) target = $region64
        $region63: #{tpu_custom_call.1} parent=59 // pred_region
          %s482 = sand.u32 %s151, 1
          %s483 = scalar_lea.sflag [#allocation4], %s482
          %s484 = sand.u32 %s151, 1
          %s485 = smul.addr %s484, 32
          %s486 = scalar_lea.vmem [#allocation7], %s485
          %487 = dma.done %s483, 512
        $region64: #{tpu_custom_call.1} parent=59 // pred_fallthru
          _
      $region60: #{tpu_custom_call.1} parent=5 // pred_fallthru
        _
    $region6: #{tpu_custom_call.1} parent=1 // loop_footer
      %s23 = sadd.s32 1, %s19
    $region7: #{tpu_custom_call.1} parent=1 // loop_footer_branch
      %18 = sbr.rel target = $region3
    $region8: #{tpu_custom_call.1} parent=1 // loop_exit
      _
    %488 = vsyncpa [#allocation3], 1
    %s489 = scalar_lea.sflag [#allocation3], 1
    %490 = vsyncpa %s489, 1
    %491 = vsyncpa [#allocation6], 1
    %s492 = scalar_lea.sflag [#allocation6], 1
    %493 = vsyncpa %s492, 1
    %494 = vsyncpa [#allocation4], 1
    %s495 = scalar_lea.sflag [#allocation4], 1
    %496 = vsyncpa %s495, 1

</llo_original>
